<compile_context>
chip_gen: v7x
topology: tpu7x:2x2x1
jax: 0.10.0
libtpu: 0.0.40
codegen_flags: <defaults>
</compile_context>

<pallas_src>
import functools

import jax
import jax.numpy as jnp
from jax.experimental import pallas as pl
from jax.experimental.pallas import tpu as pltpu

LABEL_SMOOTHING = 0.1
DICE_EPS = 1e-7  # smp DiceLoss default eps (smooth=0.0)


def _hyperloss_kernel(pred_ref, lab_ref, ce_ref, psum_ref, inter_ref,
                      ce_acc, psum_acc, inter_acc, *, hw, needs_mask):
    t = pl.program_id(1)
    last = pl.num_programs(1) - 1

    # Re-init the lane/sublane-dense accumulators at the start of each batch elem.
    @pl.when(t == 0)
    def _():
        ce_acc[...] = jnp.zeros_like(ce_acc)
        psum_acc[...] = jnp.zeros_like(psum_acc)
        inter_acc[...] = jnp.zeros_like(inter_acc)

    def body(apply_mask):
        x = pred_ref[...].astype(jnp.float32)    # (C, S, 128) logits
        lab = lab_ref[...]                       # (S, 128) int32 labels
        c, s, l = x.shape

        if apply_mask:
            row = jax.lax.broadcasted_iota(jnp.int32, (s, l), 0)
            lane = jax.lax.broadcasted_iota(jnp.int32, (s, l), 1)
            valid = ((t * s + row) * 128 + lane) < hw          # (S, 128) bool
            # Zero BEFORE the class-axis max so OOB/pad garbage (NaN/Inf)
            # cannot poison the softmax.
            x = jnp.where(valid[None], x, 0.0)

        # Stable softmax over the class axis (C leading slabs -> per-slab VPU).
        xmax = jnp.max(x, axis=0)                              # (S, 128)
        e = jnp.exp(x - xmax[None])                            # (C, S, 128)
        sumexp = jnp.sum(e, axis=0)                            # (S, 128)
        lse = xmax + jnp.log(sumexp)                           # logsumexp
        inv = pl.reciprocal(sumexp, approx=True)               # EUP slot
        p = e * inv[None]                                      # softmax probs

        cls = jax.lax.broadcasted_iota(jnp.int32, (c, s, l), 0)
        is_y = cls == lab[None]                                # (C, S, 128) bool

        # Label-smoothed CE fold: lse - (1-eps)*x[y] - (eps/C)*sum_c x[c].
        x_y = jnp.sum(jnp.where(is_y, x, 0.0), axis=0)         # (S, 128)
        sumx = jnp.sum(x, axis=0)                              # (S, 128)
        ce_pix = (lse - (1.0 - LABEL_SMOOTHING) * x_y
                  - (LABEL_SMOOTHING / c) * sumx)

        p_sel = jnp.where(is_y, p, 0.0)                        # Dice intersection
        if apply_mask:
            ce_pix = jnp.where(valid, ce_pix, 0.0)
            p = jnp.where(valid[None], p, 0.0)
            p_sel = jnp.where(valid[None], p_sel, 0.0)

        ce_acc[...] += ce_pix
        psum_acc[...] += p
        inter_acc[...] += p_sel

    if needs_mask:
        # Only the last tile contains padded / out-of-bounds pixels -> only it
        # pays the masking ops.
        pl.when(t == last)(lambda: body(True))
        pl.when(t != last)(lambda: body(False))
    else:
        body(False)

    # Collapse the accumulators exactly once per batch element.
    @pl.when(t == last)
    def _():
        ce_ref[...] = jnp.sum(ce_acc[...]).reshape(1, 1)
        psum_ref[...] = jnp.sum(jnp.sum(psum_acc[...], axis=1), axis=1,
                                keepdims=True)
        inter_ref[...] = jnp.sum(jnp.sum(inter_acc[...], axis=1), axis=1,
                                 keepdims=True)


@functools.partial(jax.jit, static_argnames=("tile_p",))
def hyperloss(pred, mask, tile_p=16384):
    """pred: (N, C, H, W) float logits, mask: (N, H, W) int labels -> scalar loss."""
    n, c, h, w = pred.shape
    hw = h * w

    # Pixels packed as (rows, 128): lane- AND sublane-dense even for C < 8.
    p_rows = pl.cdiv(hw, 128)
    hw_pad = p_rows * 128

    pred3 = pred.reshape(n, c, hw)                 # free view (keeps dtype)
    lab2 = mask.reshape(n, hw).astype(jnp.int32)
    if hw_pad != hw:
        # One-time pad copy so the (rows, 128) view exists; padded pixels fall
        # in the last tile and are masked in-kernel.
        pred3 = jnp.pad(pred3, ((0, 0), (0, 0), (0, hw_pad - hw)))
        lab2 = jnp.pad(lab2, ((0, 0), (0, hw_pad - hw)))
    pred4 = pred3.reshape(n, c, p_rows, 128)
    lab3 = lab2.reshape(n, p_rows, 128)

    # Tile = s rows of 128 pixels; take the largest that fits a ~20 MiB VMEM
    # budget (double-buffered inputs + the three f32 accumulators).
    itemsize = jnp.dtype(pred.dtype).itemsize
    per_row_bytes = 128 * (2 * c * itemsize + 2 * 4 + (2 * c + 1) * 4)
    s_cap = max(8, (20 * 1024 * 1024) // per_row_bytes)
    s = min(max(int(tile_p) // 128, 1), int(s_cap), p_rows)
    if s != p_rows and s % 8 != 0:
        s = min(max(8, (s // 8) * 8), p_rows)      # keep the (8,128) constraint
    num_tiles = pl.cdiv(p_rows, s)
    needs_mask = (num_tiles * s * 128) != hw       # padded / OOB pixels exist

    # TODO(synk): for N==1 on v7x megacore, add a parallel pixel-split grid axis
    # with per-split partial outputs summed in the glue.
    grid = (n, num_tiles)

    out_shapes = (
        jax.ShapeDtypeStruct((n, 1, 1), jnp.float32),  # per-batch CE sum
        jax.ShapeDtypeStruct((n, c, 1), jnp.float32),  # per-batch per-class sum(p)
        jax.ShapeDtypeStruct((n, c, 1), jnp.float32),  # per-batch per-class intersection
    )
    kernel = functools.partial(_hyperloss_kernel, hw=hw, needs_mask=needs_mask)

    ce_o, psum_o, inter_o = pl.pallas_call(
        kernel,
        out_shape=out_shapes,
        grid_spec=pltpu.PrefetchScalarGridSpec(
            num_scalar_prefetch=0,
            grid=grid,
            in_specs=[
                pl.BlockSpec((None, c, s, 128), lambda b, t: (b, 0, t, 0)),
                pl.BlockSpec((None, s, 128), lambda b, t: (b, t, 0)),
            ],
            out_specs=[
                pl.BlockSpec((None, 1, 1), lambda b, t: (b, 0, 0)),
                pl.BlockSpec((None, c, 1), lambda b, t: (b, 0, 0)),
                pl.BlockSpec((None, c, 1), lambda b, t: (b, 0, 0)),
            ],
            scratch_shapes=[
                pltpu.VMEM((s, 128), jnp.float32),      # CE partial sums
                pltpu.VMEM((c, s, 128), jnp.float32),   # sum(p) partials
                pltpu.VMEM((c, s, 128), jnp.float32),   # intersection partials
            ],
        ),
        compiler_params=pltpu.CompilerParams(
            dimension_semantics=("parallel", "arbitrary"),
            vmem_limit_bytes=32 * 1024 * 1024,
        ),
    )(pred4, lab3)

    # --- glue: tiny per-class / per-batch combination ---
    ce_loss = jnp.sum(ce_o) / jnp.float32(n * hw)

    psum = jnp.sum(psum_o[:, :, 0], axis=0)        # (C,)
    inter = jnp.sum(inter_o[:, :, 0], axis=0)
    # Per-class pixel counts depend only on the labels -> recomputed here from
    # the tiny label tensor instead of a 4th (C, tile) accumulator stream.
    tsum = jnp.sum(jax.nn.one_hot(mask.reshape(-1), c, dtype=jnp.float32), axis=0)

    # smp DiceLoss(mode='multiclass', from_logits=True, smooth=0, eps=1e-7)
    cardinality = psum + tsum
    dice = (2.0 * inter) / jnp.maximum(cardinality, DICE_EPS)
    class_present = (tsum > 0).astype(jnp.float32)
    dice_loss = jnp.mean((1.0 - dice) * class_present)

    # TODO(synk): labels outside [0, C) are assumed absent (PyTorch raises at
    # runtime); here they would only perturb the smoothing/dice terms.
    return ce_loss + dice_loss


def _reference_hyperloss(pred, mask):
    """Pure-JAX reference matching the PyTorch module semantics."""
    n, c, h, w = pred.shape
    logits = jnp.transpose(pred, (0, 2, 3, 1)).reshape(-1, c).astype(jnp.float32)
    labels = mask.reshape(-1).astype(jnp.int32)
    logp = jax.nn.log_softmax(logits, axis=-1)
    onehot = jax.nn.one_hot(labels, c, dtype=jnp.float32)
    eps = LABEL_SMOOTHING
    ce = -((1.0 - eps) * jnp.sum(onehot * logp, -1) + (eps / c) * jnp.sum(logp, -1))
    ce_loss = jnp.mean(ce)
    p = jnp.exp(logp)
    inter = jnp.sum(p * onehot, axis=0)
    card = jnp.sum(p, axis=0) + jnp.sum(onehot, axis=0)
    dice = 2.0 * inter / jnp.maximum(card, DICE_EPS)
    dice_loss = jnp.mean((1.0 - dice) * (jnp.sum(onehot, axis=0) > 0))
    return ce_loss + dice_loss


if __name__ == "__main__":
    key = jax.random.PRNGKey(0)
    k1, k2, k3, k4, k5, k6 = jax.random.split(key, 6)

    # Tolerance is loosened slightly because the softmax denominator uses the
    # approximate EUP reciprocal (affects only the Dice terms, ~1e-3 level).
    RTOL = ATOL = 5e-3

    # Check 1: module-consistent small shapes — single aligned tile, no mask.
    N, C, H, W = 2, 4, 16, 16
    pred = jax.random.normal(k1, (N, C, H, W), dtype=jnp.float32)
    mask = jax.random.randint(k2, (N, H, W), 0, C, dtype=jnp.int32)
    loss = jax.block_until_ready(hyperloss(pred, mask))
    ref = _reference_hyperloss(pred, mask)
    assert jnp.allclose(loss, ref, rtol=RTOL, atol=ATOL), (loss, ref)

    # Check 2: multi-tile with a ragged last tile (128-padding + OOB rows).
    N2, C2, H2, W2 = 2, 4, 36, 36          # hw=1296 -> 11 rows, 2 tiles @ s=8
    pred2 = jax.random.normal(k3, (N2, C2, H2, W2), dtype=jnp.float32)
    mask2 = jax.random.randint(k4, (N2, H2, W2), 0, C2, dtype=jnp.int32)
    loss2 = jax.block_until_ready(hyperloss(pred2, mask2, tile_p=1024))
    ref2 = _reference_hyperloss(pred2, mask2)
    assert jnp.allclose(loss2, ref2, rtol=RTOL, atol=ATOL), (loss2, ref2)

    # Check 3: multiple fully-aligned tiles (accumulation path, no mask).
    N3, C3, H3, W3 = 2, 4, 64, 64          # hw=4096 -> 32 rows, 2 tiles @ s=16
    pred3 = jax.random.normal(k5, (N3, C3, H3, W3), dtype=jnp.float32)
    mask3 = jax.random.randint(k6, (N3, H3, W3), 0, C3, dtype=jnp.int32)
    loss3 = jax.block_until_ready(hyperloss(pred3, mask3, tile_p=2048))
    ref3 = _reference_hyperloss(pred3, mask3)
    assert jnp.allclose(loss3, ref3, rtol=RTOL, atol=ATOL), (loss3, ref3)

    print("KERNEL_OK")
</pallas_src>

<mosaic_0001>
module attributes {stable_mosaic.version = 11 : i64} {
  func.func @_hyperloss_kernel(%arg0: i32, %arg1: i32, %arg2: memref<1x4x2x128xf32, #tpu.memory_space<vmem>>, %arg3: memref<1x2x128xi32, #tpu.memory_space<vmem>>, %arg4: memref<1x1x1xf32, #tpu.memory_space<vmem>>, %arg5: memref<1x4x1xf32, #tpu.memory_space<vmem>>, %arg6: memref<1x4x1xf32, #tpu.memory_space<vmem>>, %arg7: memref<2x128xf32, #tpu.memory_space<vmem>>, %arg8: memref<4x2x128xf32, #tpu.memory_space<vmem>>, %arg9: memref<4x2x128xf32, #tpu.memory_space<vmem>>) attributes {dimension_semantics = [#tpu.dimension_semantics<parallel>, #tpu.dimension_semantics<arbitrary>], iteration_bounds = array<i64: 2, 1>, scalar_prefetch = 0 : i64, scratch_operands = 3 : i64, tpu.core_type = #tpu.core_type<tc>, window_params = [{transform_indices = @transform_0, window_bounds = array<i64: 1, 4, 2, 128>}, {transform_indices = @transform_1, window_bounds = array<i64: 1, 2, 128>}, {transform_indices = @transform_2, window_bounds = array<i64: 1, 1, 1>}, {transform_indices = @transform_3, window_bounds = array<i64: 1, 4, 1>}, {transform_indices = @transform_4, window_bounds = array<i64: 1, 4, 1>}]} {
    %c0_i32 = arith.constant 0 : i32
    %0 = arith.cmpi eq, %arg1, %c0_i32 : i32
    %1 = arith.extui %0 : i1 to i32
    %c0_i32_0 = arith.constant 0 : i32
    %2 = arith.cmpi ne, %1, %c0_i32_0 : i32
    scf.if %2 {
      %cst_32 = arith.constant 0.000000e+00 : f32
      %47 = vector.broadcast %cst_32 : f32 to vector<2x128xf32>
      %c0_33 = arith.constant 0 : index
      %c0_34 = arith.constant 0 : index
      %48 = vector.load %arg7[%c0_33, %c0_34] : memref<2x128xf32, #tpu.memory_space<vmem>>, vector<2x128xf32>
      tpu.vector_store %arg7[%c0_33, %c0_34], %47 {strides = array<i32>} : memref<2x128xf32, #tpu.memory_space<vmem>>, vector<2x128xf32>,
      %cst_35 = arith.constant 0.000000e+00 : f32
      %49 = vector.broadcast %cst_35 : f32 to vector<4x2x128xf32>
      %c0_36 = arith.constant 0 : index
      %c0_37 = arith.constant 0 : index
      %c0_38 = arith.constant 0 : index
      %50 = vector.load %arg8[%c0_36, %c0_37, %c0_38] : memref<4x2x128xf32, #tpu.memory_space<vmem>>, vector<4x2x128xf32>
      tpu.vector_store %arg8[%c0_36, %c0_37, %c0_38], %49 {strides = array<i32>} : memref<4x2x128xf32, #tpu.memory_space<vmem>>, vector<4x2x128xf32>,
      %cst_39 = arith.constant 0.000000e+00 : f32
      %51 = vector.broadcast %cst_39 : f32 to vector<4x2x128xf32>
      %c0_40 = arith.constant 0 : index
      %c0_41 = arith.constant 0 : index
      %c0_42 = arith.constant 0 : index
      %52 = vector.load %arg9[%c0_40, %c0_41, %c0_42] : memref<4x2x128xf32, #tpu.memory_space<vmem>>, vector<4x2x128xf32>
      tpu.vector_store %arg9[%c0_40, %c0_41, %c0_42], %51 {strides = array<i32>} : memref<4x2x128xf32, #tpu.memory_space<vmem>>, vector<4x2x128xf32>,
    } else {
    }
    %c0 = arith.constant 0 : index
    %c0_1 = arith.constant 0 : index
    %c0_2 = arith.constant 0 : index
    %c0_3 = arith.constant 0 : index
    %3 = vector.load %arg2[%c0, %c0_1, %c0_2, %c0_3] : memref<1x4x2x128xf32, #tpu.memory_space<vmem>>, vector<1x4x2x128xf32>
    %4 = vector.shape_cast %3 : vector<1x4x2x128xf32> to vector<4x2x128xf32>
    %c0_4 = arith.constant 0 : index
    %c0_5 = arith.constant 0 : index
    %c0_6 = arith.constant 0 : index
    %5 = vector.load %arg3[%c0_4, %c0_5, %c0_6] : memref<1x2x128xi32, #tpu.memory_space<vmem>>, vector<1x2x128xi32>
    %6 = vector.shape_cast %5 : vector<1x2x128xi32> to vector<2x128xi32>
    %cst = arith.constant dense<0xFF800000> : vector<2x128xf32>
    %7 = vector.multi_reduction <maximumf>, %4, %cst [0] : vector<4x2x128xf32> to vector<2x128xf32>
    %8 = vector.shape_cast %7 : vector<2x128xf32> to vector<1x2x128xf32>
    %9 = vector.broadcast %8 : vector<1x2x128xf32> to vector<4x2x128xf32>
    %10 = arith.subf %4, %9 : vector<4x2x128xf32>
    %11 = math.exp %10 : vector<4x2x128xf32>
    %cst_7 = arith.constant dense<0.000000e+00> : vector<2x128xf32>
    %12 = vector.multi_reduction <add>, %11, %cst_7 [0] : vector<4x2x128xf32> to vector<2x128xf32>
    %13 = math.log %12 : vector<2x128xf32>
    %14 = arith.addf %7, %13 : vector<2x128xf32>
    %15 = tpu.reciprocal %12 {approx = true} : vector<2x128xf32> -> vector<2x128xf32>
    %16 = vector.shape_cast %15 : vector<2x128xf32> to vector<1x2x128xf32>
    %17 = vector.broadcast %16 : vector<1x2x128xf32> to vector<4x2x128xf32>
    %18 = arith.mulf %11, %17 : vector<4x2x128xf32>
    %19 = tpu.iota {dimensions = array<i32: 0>} : vector<4x2x128xi32>
    %20 = vector.shape_cast %6 : vector<2x128xi32> to vector<1x2x128xi32>
    %21 = vector.broadcast %20 : vector<1x2x128xi32> to vector<4x2x128xi32>
    %22 = arith.cmpi eq, %19, %21 : vector<4x2x128xi32>
    %cst_8 = arith.constant 0.000000e+00 : f32
    %23 = vector.broadcast %cst_8 : f32 to vector<4x2x128xf32>
    %24 = arith.select %22, %4, %23 : vector<4x2x128xi1>, vector<4x2x128xf32>
    %cst_9 = arith.constant dense<0.000000e+00> : vector<2x128xf32>
    %25 = vector.multi_reduction <add>, %24, %cst_9 [0] : vector<4x2x128xf32> to vector<2x128xf32>
    %cst_10 = arith.constant dense<0.000000e+00> : vector<2x128xf32>
    %26 = vector.multi_reduction <add>, %4, %cst_10 [0] : vector<4x2x128xf32> to vector<2x128xf32>
    %cst_11 = arith.constant 0.899999976 : f32
    %27 = vector.broadcast %cst_11 : f32 to vector<2x128xf32>
    %28 = arith.mulf %27, %25 : vector<2x128xf32>
    %29 = arith.subf %14, %28 : vector<2x128xf32>
    %cst_12 = arith.constant 2.500000e-02 : f32
    %30 = vector.broadcast %cst_12 : f32 to vector<2x128xf32>
    %31 = arith.mulf %30, %26 : vector<2x128xf32>
    %32 = arith.subf %29, %31 : vector<2x128xf32>
    %cst_13 = arith.constant 0.000000e+00 : f32
    %33 = vector.broadcast %cst_13 : f32 to vector<4x2x128xf32>
    %34 = arith.select %22, %18, %33 : vector<4x2x128xi1>, vector<4x2x128xf32>
    %c0_14 = arith.constant 0 : index
    %c0_15 = arith.constant 0 : index
    %35 = vector.load %arg7[%c0_14, %c0_15] : memref<2x128xf32, #tpu.memory_space<vmem>>, vector<2x128xf32>
    %36 = arith.addf %35, %32 : vector<2x128xf32>
    %c0_16 = arith.constant 0 : index
    %c0_17 = arith.constant 0 : index
    %37 = vector.load %arg7[%c0_16, %c0_17] : memref<2x128xf32, #tpu.memory_space<vmem>>, vector<2x128xf32>
    tpu.vector_store %arg7[%c0_16, %c0_17], %36 {strides = array<i32>} : memref<2x128xf32, #tpu.memory_space<vmem>>, vector<2x128xf32>,
    %c0_18 = arith.constant 0 : index
    %c0_19 = arith.constant 0 : index
    %c0_20 = arith.constant 0 : index
    %38 = vector.load %arg8[%c0_18, %c0_19, %c0_20] : memref<4x2x128xf32, #tpu.memory_space<vmem>>, vector<4x2x128xf32>
    %39 = arith.addf %38, %18 : vector<4x2x128xf32>
    %c0_21 = arith.constant 0 : index
    %c0_22 = arith.constant 0 : index
    %c0_23 = arith.constant 0 : index
    %40 = vector.load %arg8[%c0_21, %c0_22, %c0_23] : memref<4x2x128xf32, #tpu.memory_space<vmem>>, vector<4x2x128xf32>
    tpu.vector_store %arg8[%c0_21, %c0_22, %c0_23], %39 {strides = array<i32>} : memref<4x2x128xf32, #tpu.memory_space<vmem>>, vector<4x2x128xf32>,
    %c0_24 = arith.constant 0 : index
    %c0_25 = arith.constant 0 : index
    %c0_26 = arith.constant 0 : index
    %41 = vector.load %arg9[%c0_24, %c0_25, %c0_26] : memref<4x2x128xf32, #tpu.memory_space<vmem>>, vector<4x2x128xf32>
    %42 = arith.addf %41, %34 : vector<4x2x128xf32>
    %c0_27 = arith.constant 0 : index
    %c0_28 = arith.constant 0 : index
    %c0_29 = arith.constant 0 : index
    %43 = vector.load %arg9[%c0_27, %c0_28, %c0_29] : memref<4x2x128xf32, #tpu.memory_space<vmem>>, vector<4x2x128xf32>
    tpu.vector_store %arg9[%c0_27, %c0_28, %c0_29], %42 {strides = array<i32>} : memref<4x2x128xf32, #tpu.memory_space<vmem>>, vector<4x2x128xf32>,
    %c0_i32_30 = arith.constant 0 : i32
    %44 = arith.cmpi eq, %arg1, %c0_i32_30 : i32
    %45 = arith.extui %44 : i1 to i32
    %c0_i32_31 = arith.constant 0 : i32
    %46 = arith.cmpi ne, %45, %c0_i32_31 : i32
    scf.if %46 {
      %c0_32 = arith.constant 0 : index
      %c0_33 = arith.constant 0 : index
      %47 = vector.load %arg7[%c0_32, %c0_33] : memref<2x128xf32, #tpu.memory_space<vmem>>, vector<2x128xf32>
      %48 = vector.shape_cast %47 : vector<2x128xf32> to vector<1x2x128xf32>
      %cst_34 = arith.constant dense<0.000000e+00> : vector<1xf32>
      %49 = vector.multi_reduction <add>, %48, %cst_34 [1, 2] : vector<1x2x128xf32> to vector<1xf32>
      %50 = vector.shape_cast %49 : vector<1xf32> to vector<1x1x1xf32>
      %51 = vector.extract %50[0, 0, 0] : f32 from vector<1x1x1xf32>
      %52 = vector.broadcast %51 : f32 to vector<1x1xf32>
      %c0_35 = arith.constant 0 : index
      %c0_36 = arith.constant 0 : index
      %c0_37 = arith.constant 0 : index
      %53 = vector.load %arg4[%c0_35, %c0_36, %c0_37] : memref<1x1x1xf32, #tpu.memory_space<vmem>>, vector<1x1x1xf32>
      %54 = vector.shape_cast %53 : vector<1x1x1xf32> to vector<1x1xf32>
      %55 = vector.shape_cast %52 : vector<1x1xf32> to vector<1x1x1xf32>
      tpu.vector_store %arg4[%c0_35, %c0_36, %c0_37], %55 {strides = array<i32>} : memref<1x1x1xf32, #tpu.memory_space<vmem>>, vector<1x1x1xf32>,
      %c0_38 = arith.constant 0 : index
      %c0_39 = arith.constant 0 : index
      %c0_40 = arith.constant 0 : index
      %56 = vector.load %arg8[%c0_38, %c0_39, %c0_40] : memref<4x2x128xf32, #tpu.memory_space<vmem>>, vector<4x2x128xf32>
      %cst_41 = arith.constant dense<0.000000e+00> : vector<4x128xf32>
      %57 = vector.multi_reduction <add>, %56, %cst_41 [1] : vector<4x2x128xf32> to vector<4x128xf32>
      %cst_42 = arith.constant dense<0.000000e+00> : vector<4xf32>
      %58 = vector.multi_reduction <add>, %57, %cst_42 [1] : vector<4x128xf32> to vector<4xf32>
      %59 = vector.shape_cast %58 : vector<4xf32> to vector<4x1xf32>
      %c0_43 = arith.constant 0 : index
      %c0_44 = arith.constant 0 : index
      %c0_45 = arith.constant 0 : index
      %60 = vector.load %arg5[%c0_43, %c0_44, %c0_45] : memref<1x4x1xf32, #tpu.memory_space<vmem>>, vector<1x4x1xf32>
      %61 = vector.shape_cast %60 : vector<1x4x1xf32> to vector<4x1xf32>
      %62 = vector.shape_cast %59 : vector<4x1xf32> to vector<1x4x1xf32>
      tpu.vector_store %arg5[%c0_43, %c0_44, %c0_45], %62 {strides = array<i32>} : memref<1x4x1xf32, #tpu.memory_space<vmem>>, vector<1x4x1xf32>,
      %c0_46 = arith.constant 0 : index
      %c0_47 = arith.constant 0 : index
      %c0_48 = arith.constant 0 : index
      %63 = vector.load %arg9[%c0_46, %c0_47, %c0_48] : memref<4x2x128xf32, #tpu.memory_space<vmem>>, vector<4x2x128xf32>
      %cst_49 = arith.constant dense<0.000000e+00> : vector<4x128xf32>
      %64 = vector.multi_reduction <add>, %63, %cst_49 [1] : vector<4x2x128xf32> to vector<4x128xf32>
      %cst_50 = arith.constant dense<0.000000e+00> : vector<4xf32>
      %65 = vector.multi_reduction <add>, %64, %cst_50 [1] : vector<4x128xf32> to vector<4xf32>
      %66 = vector.shape_cast %65 : vector<4xf32> to vector<4x1xf32>
      %c0_51 = arith.constant 0 : index
      %c0_52 = arith.constant 0 : index
      %c0_53 = arith.constant 0 : index
      %67 = vector.load %arg6[%c0_51, %c0_52, %c0_53] : memref<1x4x1xf32, #tpu.memory_space<vmem>>, vector<1x4x1xf32>
      %68 = vector.shape_cast %67 : vector<1x4x1xf32> to vector<4x1xf32>
      %69 = vector.shape_cast %66 : vector<4x1xf32> to vector<1x4x1xf32>
      tpu.vector_store %arg6[%c0_51, %c0_52, %c0_53], %69 {strides = array<i32>} : memref<1x4x1xf32, #tpu.memory_space<vmem>>, vector<1x4x1xf32>,
    } else {
    }
    return
  }
  func.func @transform_0(%arg0: i32, %arg1: i32) -> (i32, i32, i32, i32) {
    %c0_i32 = arith.constant 0 : i32
    %c0_i32_0 = arith.constant 0 : i32
    %c0_i32_1 = arith.constant 0 : i32
    return %arg0, %c0_i32, %arg1, %c0_i32_0 : i32, i32, i32, i32
  }
  func.func @transform_1(%arg0: i32, %arg1: i32) -> (i32, i32, i32) {
    %c0_i32 = arith.constant 0 : i32
    %c0_i32_0 = arith.constant 0 : i32
    return %arg0, %arg1, %c0_i32 : i32, i32, i32
  }
  func.func @transform_2(%arg0: i32, %arg1: i32) -> (i32, i32, i32) {
    %c0_i32 = arith.constant 0 : i32
    %c0_i32_0 = arith.constant 0 : i32
    %c0_i32_1 = arith.constant 0 : i32
    return %arg0, %c0_i32, %c0_i32_0 : i32, i32, i32
  }
  func.func @transform_3(%arg0: i32, %arg1: i32) -> (i32, i32, i32) {
    %c0_i32 = arith.constant 0 : i32
    %c0_i32_0 = arith.constant 0 : i32
    %c0_i32_1 = arith.constant 0 : i32
    return %arg0, %c0_i32, %c0_i32_0 : i32, i32, i32
  }
  func.func @transform_4(%arg0: i32, %arg1: i32) -> (i32, i32, i32) {
    %c0_i32 = arith.constant 0 : i32
    %c0_i32_0 = arith.constant 0 : i32
    %c0_i32_1 = arith.constant 0 : i32
    return %arg0, %c0_i32, %c0_i32_0 : i32, i32, i32
  }
}

</mosaic_0001>

<llo_original>
// kernel: eq.1
$region0: #{eq.1}
  %s0 = inlined_call_operand.vmem [shape: s32[2,16,16], index: 0, kind: input, shape index: {}]
  %s1 = inlined_call_operand.vmem [shape: s32[512], index: 1, kind: output, shape index: {}]
  $region1: #{eq.1} parent=0
    #allocation0 [shape = 'u8[4096]{0}', space=vmem, size = 0x1000, scoped, tag = 'scoped mem for output reshape']
    %v2 = vld [vmem:[%s0] ss:$8 sm:$0xf]
    %vm3 = vcmask 130048
    %4 = vst.msk [vmem:[#allocation0] sm:$0xf] %vm3, %v2
    %s5 = scalar_lea.vmem %s0, 7
    %v6 = vld [vmem:[%s5] ss:$8 sm:$0xf]
    %7 = vrot.lane.b32.xlu0 %v6, 112
    %v8 = vpop.permute.xlu0 %7
    %vm9 = vcmask 1048448
    %10 = vst.msk [vmem:[#allocation0] sm:$0xf] %vm9, %v8
    %s11 = scalar_lea.vmem %s0, 6
    %v12 = vld [vmem:[%s11] ss:$8 sm:$0xf]
    %13 = vrot.lane.b32.xlu0 %v12, 96
    %v14 = vpop.permute.xlu0 %13
    %vm15 = vcmask 917248
    %16 = vst.msk [vmem:[#allocation0] sm:$0xf] %vm15, %v14
    %s17 = scalar_lea.vmem %s0, 5
    %v18 = vld [vmem:[%s17] ss:$8 sm:$0xf]
    %19 = vrot.lane.b32.xlu0 %v18, 80
    %v20 = vpop.permute.xlu0 %19
    %vm21 = vcmask 786048
    %22 = vst.msk [vmem:[#allocation0] sm:$0xf] %vm21, %v20
    %s23 = scalar_lea.vmem %s0, 4
    %v24 = vld [vmem:[%s23] ss:$8 sm:$0xf]
    %25 = vrot.lane.b32.xlu0 %v24, 64
    %v26 = vpop.permute.xlu0 %25
    %vm27 = vcmask 654848
    %28 = vst.msk [vmem:[#allocation0] sm:$0xf] %vm27, %v26
    %s29 = scalar_lea.vmem %s0, 3
    %v30 = vld [vmem:[%s29] ss:$8 sm:$0xf]
    %31 = vrot.lane.b32.xlu0 %v30, 48
    %v32 = vpop.permute.xlu0 %31
    %vm33 = vcmask 523648
    %34 = vst.msk [vmem:[#allocation0] sm:$0xf] %vm33, %v32
    %s35 = scalar_lea.vmem %s0, 2
    %v36 = vld [vmem:[%s35] ss:$8 sm:$0xf]
    %37 = vrot.lane.b32.xlu0 %v36, 32
    %v38 = vpop.permute.xlu0 %37
    %vm39 = vcmask 392448
    %40 = vst.msk [vmem:[#allocation0] sm:$0xf] %vm39, %v38
    %s41 = scalar_lea.vmem %s0, 1
    %v42 = vld [vmem:[%s41] ss:$8 sm:$0xf]
    %43 = vrot.lane.b32.xlu0 %v42, 16
    %v44 = vpop.permute.xlu0 %43
    %vm45 = vcmask 261248
    %46 = vst.msk [vmem:[#allocation0] sm:$0xf] %vm45, %v44
    %s48 = sshllo.u32 0, 4
    %v50 = vld [vmem:[#allocation0] sm:%s48]
    %s51 = sshllo.u32 0, 4
    %52 = vst [vmem:[%s1] sm:%s51] %v50

// kernel: hyperloss.1
$region0: #{hyperloss.1}
  #allocation0 [shape = 'u32[]', space=smem, size = 0x4, offset = 0x4, fixed_abs, tag = 'smem constant byte address 0x4 - core index']
  #allocation1 [shape = 'u32[144,128]{1,0:T(1,128)}', space=vmem, size = 0x12000, scoped, tag = 'internal scratch']
  #allocation2 [shape = 'f32[2,128]{1,0:T(2,128)}', space=vmem, size = 0x400, scoped, tag = 'scratch operand']
  #allocation3 [shape = 'f32[4,2,128]{2,1,0:T(2,128)}', space=vmem, size = 0x1000, scoped, tag = 'scratch operand']
  #allocation4 [shape = 'f32[4,2,128]{2,1,0:T(2,128)}', space=vmem, size = 0x1000, scoped, tag = 'scratch operand']
  %s0 = inlined_call_operand.vmem [shape: f32[2,4,2,128], index: 0, kind: input, shape index: {}]
  %s1 = inlined_call_operand.vmem [shape: s32[2,2,128], index: 1, kind: input, shape index: {}]
  %s2 = inlined_call_operand.vmem [shape: f32[2,1,1], index: 2, kind: output, shape index: {0}]
  %s3 = inlined_call_operand.vmem [shape: f32[2,4,1], index: 3, kind: output, shape index: {1}]
  %s4 = inlined_call_operand.vmem [shape: f32[2,4,1], index: 4, kind: output, shape index: {2}]
  %5 = xla_tuple %s2, %s3, %s4
  %s6 = sld [smem:[#allocation0]]
  $region65: #{hyperloss.1} parent=0
    _
  %s8 = ssub.s32 1, %s6
  %s9 = scalar_select 0, %s8, %s6
  loop: start=0, step=1, limit=4
  $region2: #{hyperloss.1} parent=0 // loop_pre_header
    _
  $region3: #{hyperloss.1} parent=0 // loop_header
    %s11 = sphi 0, %s15
    %p12 = scmp.ge.s32.totalorder %s11, 4
    %s18 = sphi 0, %s30
    %s19 = sphi 0, %s26
    %s20 = sphi 0, %s18
    %s21 = sphi 0, %s19
    %s22 = sphi 0, %s20
    %s23 = sphi 0, %s21
    %s35 = sphi 0, %s37
    %s38 = sphi 0, %s35
    %s39 = sphi 0, %s38
    %s55 = sphi 0, %s39
    %s63 = sphi 0, %s65
    %s66 = sphi 0, %s63
    %s67 = sphi 0, %s66
    %s83 = sphi 0, %s67
    %s89 = sphi 0, %s91
    %s92 = sphi 0, %s89
    %s93 = sphi 0, %s92
    %s109 = sphi 0, %s93
    %s115 = sphi 0, %s117
    %s118 = sphi 0, %s115
    %s119 = sphi 0, %s118
    %s135 = sphi 0, %s119
    %s141 = sphi 0, %s143
    %s144 = sphi 0, %s141
    %s145 = sphi 0, %s144
    %s161 = sphi 0, %s145
  $region4: #{hyperloss.1} parent=0 // loop_header_branch
    %14 = sbr.rel (%p12) target = $region8
  $region5: #{hyperloss.1} parent=0 // loop_body
    %s16 = ssub.s32 %s11, 1
    %s17 = ssub.s32 %s11, 2
    %s24 = sadd.s32 1, %s19
    %p25 = scmp.ge.s32.totalorder %s24, 1
    %s26 = scalar_select %p25, 0, %s24
    %s27 = sadd.s32 1, %s18
    %s28 = scalar_select %p25, %s27, %s18
    %p29 = scmp.ge.s32.totalorder %s28, 2
    %s30 = scalar_select %p29, 0, %s28
    %s31 = ssub.s32 %s18, %s30
    %s32 = ssub.s32 %s19, %s26
    %s33 = sor.u32 %s31, %s32
    %p34 = scmp.eq.s32.totalorder %s33, 0
    %s36 = sadd.s32 %s35, 1
    %s37 = scalar_select %p34, %s35, %s36
    %p40 = pneg %p34
    %p41 = scmp.eq.s32.totalorder %s11, 1
    %p42 = por %p40, %p41
    %p43 = scmp.ne.s32.totalorder %s35, %s38
    %p44 = scmp.eq.s32.totalorder %s11, 0
    %p45 = por %p43, %p44
    %p46 = scmp.ne.s32.totalorder %s35, %s38
    %p47 = scmp.eq.s32.totalorder %s16, 1
    %p48 = por %p46, %p47
    %p49 = scmp.ne.s32.totalorder %s38, %s39
    %p50 = scmp.eq.s32.totalorder %s16, 0
    %p51 = por %p49, %p50
    %p52 = scmp.ne.s32.totalorder %s38, %s39
    %p53 = scmp.eq.s32.totalorder %s17, 1
    %p54 = por %p52, %p53
    %p56 = scmp.ne.s32.totalorder %s39, %s55
    %p57 = scmp.eq.s32.totalorder %s17, 0
    %p58 = por %p56, %p57
    %s59 = ssub.s32 %s18, %s30
    %s60 = ssub.s32 %s19, %s26
    %s61 = sor.u32 %s59, %s60
    %p62 = scmp.eq.s32.totalorder %s61, 0
    %s64 = sadd.s32 %s63, 1
    %s65 = scalar_select %p62, %s63, %s64
    %p68 = pneg %p62
    %p69 = scmp.eq.s32.totalorder %s11, 1
    %p70 = por %p68, %p69
    %p71 = scmp.ne.s32.totalorder %s63, %s66
    %p72 = scmp.eq.s32.totalorder %s11, 0
    %p73 = por %p71, %p72
    %p74 = scmp.ne.s32.totalorder %s63, %s66
    %p75 = scmp.eq.s32.totalorder %s16, 1
    %p76 = por %p74, %p75
    %p77 = scmp.ne.s32.totalorder %s66, %s67
    %p78 = scmp.eq.s32.totalorder %s16, 0
    %p79 = por %p77, %p78
    %p80 = scmp.ne.s32.totalorder %s66, %s67
    %p81 = scmp.eq.s32.totalorder %s17, 1
    %p82 = por %p80, %p81
    %p84 = scmp.ne.s32.totalorder %s67, %s83
    %p85 = scmp.eq.s32.totalorder %s17, 0
    %p86 = por %p84, %p85
    %s87 = ssub.s32 %s18, %s30
    %p88 = scmp.eq.s32.totalorder %s87, 0
    %s90 = sadd.s32 %s89, 1
    %s91 = scalar_select %p88, %s89, %s90
    %p94 = pneg %p88
    %p95 = scmp.eq.s32.totalorder %s11, 1
    %p96 = por %p94, %p95
    %p97 = scmp.ne.s32.totalorder %s89, %s92
    %p98 = scmp.eq.s32.totalorder %s11, 0
    %p99 = por %p97, %p98
    %p100 = scmp.ne.s32.totalorder %s89, %s92
    %p101 = scmp.eq.s32.totalorder %s16, 1
    %p102 = por %p100, %p101
    %p103 = scmp.ne.s32.totalorder %s92, %s93
    %p104 = scmp.eq.s32.totalorder %s16, 0
    %p105 = por %p103, %p104
    %p106 = scmp.ne.s32.totalorder %s92, %s93
    %p107 = scmp.eq.s32.totalorder %s17, 1
    %p108 = por %p106, %p107
    %p110 = scmp.ne.s32.totalorder %s93, %s109
    %p111 = scmp.eq.s32.totalorder %s17, 0
    %p112 = por %p110, %p111
    %s113 = ssub.s32 %s18, %s30
    %p114 = scmp.eq.s32.totalorder %s113, 0
    %s116 = sadd.s32 %s115, 1
    %s117 = scalar_select %p114, %s115, %s116
    %p120 = pneg %p114
    %p121 = scmp.eq.s32.totalorder %s11, 1
    %p122 = por %p120, %p121
    %p123 = scmp.ne.s32.totalorder %s115, %s118
    %p124 = scmp.eq.s32.totalorder %s11, 0
    %p125 = por %p123, %p124
    %p126 = scmp.ne.s32.totalorder %s115, %s118
    %p127 = scmp.eq.s32.totalorder %s16, 1
    %p128 = por %p126, %p127
    %p129 = scmp.ne.s32.totalorder %s118, %s119
    %p130 = scmp.eq.s32.totalorder %s16, 0
    %p131 = por %p129, %p130
    %p132 = scmp.ne.s32.totalorder %s118, %s119
    %p133 = scmp.eq.s32.totalorder %s17, 1
    %p134 = por %p132, %p133
    %p136 = scmp.ne.s32.totalorder %s119, %s135
    %p137 = scmp.eq.s32.totalorder %s17, 0
    %p138 = por %p136, %p137
    %s139 = ssub.s32 %s18, %s30
    %p140 = scmp.eq.s32.totalorder %s139, 0
    %s142 = sadd.s32 %s141, 1
    %s143 = scalar_select %p140, %s141, %s142
    %p146 = pneg %p140
    %p147 = scmp.eq.s32.totalorder %s11, 1
    %p148 = por %p146, %p147
    %p149 = scmp.ne.s32.totalorder %s141, %s144
    %p150 = scmp.eq.s32.totalorder %s11, 0
    %p151 = por %p149, %p150
    %p152 = scmp.ne.s32.totalorder %s141, %s144
    %p153 = scmp.eq.s32.totalorder %s16, 1
    %p154 = por %p152, %p153
    %p155 = scmp.ne.s32.totalorder %s144, %s145
    %p156 = scmp.eq.s32.totalorder %s16, 0
    %p157 = por %p155, %p156
    %p158 = scmp.ne.s32.totalorder %s144, %s145
    %p159 = scmp.eq.s32.totalorder %s17, 1
    %p160 = por %p158, %p159
    %p162 = scmp.ne.s32.totalorder %s145, %s161
    %p163 = scmp.eq.s32.totalorder %s17, 0
    %p164 = por %p162, %p163
    %p165 = scmp.le.s32.totalorder 1, %s11
    %p166 = scmp.lt.s32.totalorder %s11, 3
    %p167 = pnand %p165, %p166
    %p168 = pneg %p167
    // Predicated region
    $region9: #{hyperloss.1} parent=5 // pred_check
      _
    $region10: #{hyperloss.1} parent=5 // pred_check_branch
      %170 = sbr.rel (%p167) target = $region12
    $region11: #{hyperloss.1} parent=5 // pred_region
      %s171 = ssub.s32 %s11, 1
    $region12: #{hyperloss.1} parent=5 // pred_fallthru
      _
    %p172 = scmp.lt.s32.totalorder %s11, 2
    // Predicated region
    $region13: #{hyperloss.1} parent=5 // pred_check
      %p173 = pneg %p172
    $region14: #{hyperloss.1} parent=5 // pred_check_branch
      %175 = sbr.rel (%p173) target = $region16
    $region15: #{hyperloss.1} parent=5 // pred_region
      // Predicated region
      $region17: #{hyperloss.1} parent=15 // pred_check
        %p176 = pneg %p45
      $region18: #{hyperloss.1} parent=15 // pred_check_branch
        %178 = sbr.rel (%p176) target = $region20
      $region19: #{hyperloss.1} parent=15 // pred_region
        %p179 = scmp.lt.s32.totalorder %s18, 1
        %s180 = scalar_select %p179, %s18, 1
        %p181 = scmp.lt.s32.totalorder %s19, 0
        %s182 = scalar_select %p181, %s19, 0
        %s183 = smul.addr %s180, 4
        %s184 = sadd.s32 %s182, %s183
        %s185 = smul.addr %s184, 2
        %s186 = scalar_lea.vmem %s0, %s185
      $region20: #{hyperloss.1} parent=15 // pred_fallthru
        _
      // Predicated region
      $region21: #{hyperloss.1} parent=15 // pred_check
        %p187 = pneg %p73
      $region22: #{hyperloss.1} parent=15 // pred_check_branch
        %189 = sbr.rel (%p187) target = $region24
      $region23: #{hyperloss.1} parent=15 // pred_region
        %p190 = scmp.lt.s32.totalorder %s18, 1
        %s191 = scalar_select %p190, %s18, 1
        %p192 = scmp.lt.s32.totalorder %s19, 0
        %s193 = scalar_select %p192, %s19, 0
        %s194 = sadd.s32 %s193, %s191
        %s195 = smul.addr %s194, 2
        %s196 = scalar_lea.vmem %s1, %s195
      $region24: #{hyperloss.1} parent=15 // pred_fallthru
        _
    $region16: #{hyperloss.1} parent=5 // pred_fallthru
      _
    %p197 = scmp.le.s32.totalorder 1, %s11
    %p198 = scmp.lt.s32.totalorder %s11, 3
    %p199 = pnand %p197, %p198
    %p200 = pneg %p199
    // Predicated region
    $region25: #{hyperloss.1} parent=5 // pred_check
      _
    $region26: #{hyperloss.1} parent=5 // pred_check_branch
      %202 = sbr.rel (%p199) target = $region28
    $region27: #{hyperloss.1} parent=5 // pred_region
      %s203 = ssub.s32 %s11, 1
      %p204 = scmp.lt.s32.totalorder %s20, 1
      %s205 = scalar_select %p204, %s20, 1
      %p206 = scmp.lt.s32.totalorder %s21, 0
      %s207 = scalar_select %p206, %s21, 0
      %s208 = smul.addr %s205, 4
      %s209 = sadd.s32 %s207, %s208
      %s210 = smul.addr %s209, 2
      %s211 = scalar_lea.vmem %s0, %s210
      %p212 = pneg %p51
      %p213 = pneg %p48
      %p214 = scmp.lt.s32.totalorder %s20, 1
      %s215 = scalar_select %p214, %s20, 1
      %p216 = scmp.lt.s32.totalorder %s21, 0
      %s217 = scalar_select %p216, %s21, 0
      %s218 = sadd.s32 %s217, %s215
      %s219 = smul.addr %s218, 2
      %s220 = scalar_lea.vmem %s1, %s219
      %p221 = pneg %p79
      %p222 = pneg %p76
      %p223 = pneg %p105
      %p224 = pneg %p102
      %p225 = scmp.lt.s32.totalorder %s20, 1
      %s226 = scalar_select %p225, %s20, 1
      %s227 = scalar_lea.vmem %s2, %s226
      %p228 = pneg %p131
      %p229 = pneg %p128
      %p230 = scmp.lt.s32.totalorder %s20, 1
      %s231 = scalar_select %p230, %s20, 1
      %s232 = smul.addr %s231, 4
      %s233 = scalar_lea.vmem %s3, %s232
      %p234 = pneg %p157
      %p235 = pneg %p154
      %p236 = scmp.lt.s32.totalorder %s20, 1
      %s237 = scalar_select %p236, %s20, 1
      %s238 = smul.addr %s237, 4
      %s239 = scalar_lea.vmem %s4, %s238
      %p240 = scmp.lt.s32.totalorder %s20, 1
      %s241 = scalar_select %p240, %s20, 1
      %p242 = scmp.lt.s32.totalorder %s21, 0
      %s243 = scalar_select %p242, %s21, 0
      %s244 = smul.addr %s241, 4
      %s245 = sadd.s32 %s243, %s244
      %s246 = smul.addr %s245, 2
      %s247 = scalar_lea.vmem %s0, %s246
      %p248 = scmp.lt.s32.totalorder %s20, 1
      %s249 = scalar_select %p248, %s20, 1
      %p250 = scmp.lt.s32.totalorder %s21, 0
      %s251 = scalar_select %p250, %s21, 0
      %s252 = sadd.s32 %s251, %s249
      %s253 = smul.addr %s252, 2
      %s254 = scalar_lea.vmem %s1, %s253
      %p255 = scmp.lt.s32.totalorder %s20, 1
      %s256 = scalar_select %p255, %s20, 1
      %s257 = scalar_lea.vmem %s2, %s256
      %p258 = scmp.lt.s32.totalorder %s20, 1
      %s259 = scalar_select %p258, %s20, 1
      %s260 = smul.addr %s259, 4
      %s261 = scalar_lea.vmem %s3, %s260
      %p262 = scmp.lt.s32.totalorder %s20, 1
      %s263 = scalar_select %p262, %s20, 1
      %s264 = smul.addr %s263, 4
      %s265 = scalar_lea.vmem %s4, %s264
      %p266 = scmp.eq.s32.totalorder %s21, 0
      // Predicated region
      $region29: #{hyperloss.1} parent=27 // pred_check
        %p267 = pneg %p266
      $region30: #{hyperloss.1} parent=27 // pred_check_branch
        %269 = sbr.rel (%p267) target = $region32
      $region31: #{hyperloss.1} parent=27 // pred_region
        %270 = vst [vmem:[#allocation2] sm:$0x3] 0.0
        %271 = vst [vmem:[#allocation3] sm:$0x3] 0.0
        %272 = vst [vmem:[#allocation3 + $0x2] sm:$0x3] 0.0
        %273 = vst [vmem:[#allocation3 + $0x4] sm:$0x3] 0.0
        %274 = vst [vmem:[#allocation3 + $0x6] sm:$0x3] 0.0
        %275 = vst [vmem:[#allocation4] sm:$0x3] 0.0
        %276 = vst [vmem:[#allocation4 + $0x2] sm:$0x3] 0.0
        %277 = vst [vmem:[#allocation4 + $0x4] sm:$0x3] 0.0
        %278 = vst [vmem:[#allocation4 + $0x6] sm:$0x3] 0.0
      $region32: #{hyperloss.1} parent=27 // pred_fallthru
        _
      %v279 = vld [vmem:[%s247] sm:$0x3]
      %v280 = vld [vmem:[%s247 + $0x2] sm:$0x3]
      %v281 = vld [vmem:[%s247 + $0x4] sm:$0x3]
      %v282 = vld [vmem:[%s247 + $0x6] sm:$0x3]
      %v283 = vld [vmem:[%s254] sm:$0x3]
      %vm284 = vcmask 1041408
      %v285 = vsel %vm284, %v279, -inf
      %v286 = vsel %vm284, %v280, -inf
      %v287 = vsel %vm284, %v281, -inf
      %v288 = vsel %vm284, %v282, -inf
      %v289 = vmax.f32 %v285, %v286
      %v290 = vmax.f32 %v287, %v288
      %v291 = vmax.f32 %v289, %v290
      %v292 = vsub.f32 %v279, %v291
      %v293 = vsub.f32 %v280, %v291
      %v294 = vsub.f32 %v281, %v291
      %v295 = vsub.f32 %v282, %v291
      %v296 = vmul.f32 %v292, 1.442695
      %v297 = vpow.pop %v296
      %v298 = vmul.f32 %v293, 1.442695
      %v299 = vpow.pop %v298
      %v300 = vmul.f32 %v294, 1.442695
      %v301 = vpow.pop %v300
      %v302 = vmul.f32 %v295, 1.442695
      %v303 = vpow.pop %v302
      %v304 = vsel %vm284, %v297, 0.0
      %v305 = vsel %vm284, %v299, 0.0
      %v306 = vadd.f32 %v304, %v305
      %v307 = vsel %vm284, %v301, 0.0
      %v308 = vadd.f32 %v306, %v307
      %v309 = vsel %vm284, %v303, 0.0
      %v310 = vadd.f32 %v308, %v309
      %v311 = vlog2.pop %v310
      %v312 = vmul.f32 %v311, 0.6931472
      %v313 = vadd.f32 %v291, %v312
      %v314 = vrcp.pop %v310
      %v315 = vmul.f32 %v297, %v314
      %v316 = vmul.f32 %v299, %v314
      %v317 = vmul.f32 %v301, %v314
      %v318 = vmul.f32 %v303, %v314
      %vm319 = vcmp.eq.s32.totalorder %v283, 0
      %vm320 = vcmp.eq.s32.totalorder %v283, 1
      %vm321 = vcmp.eq.s32.totalorder %v283, 2
      %vm322 = vcmp.eq.s32.totalorder %v283, 3
      %v323 = vsel %vm319, %v279, 0.0
      %v324 = vsel %vm320, %v280, 0.0
      %v325 = vsel %vm321, %v281, 0.0
      %v326 = vsel %vm322, %v282, 0.0
      %v327 = vsel %vm284, %v323, 0.0
      %v328 = vsel %vm284, %v324, 0.0
      %v329 = vadd.f32 %v327, %v328
      %v330 = vsel %vm284, %v325, 0.0
      %v331 = vadd.f32 %v329, %v330
      %v332 = vsel %vm284, %v326, 0.0
      %v333 = vadd.f32 %v331, %v332
      %v334 = vsel %vm284, %v279, 0.0
      %v335 = vsel %vm284, %v280, 0.0
      %v336 = vadd.f32 %v334, %v335
      %v337 = vsel %vm284, %v281, 0.0
      %v338 = vadd.f32 %v336, %v337
      %v339 = vsel %vm284, %v282, 0.0
      %v340 = vadd.f32 %v338, %v339
      %v341 = vmul.f32 %v333, 0.9
      %v342 = vsub.f32 %v313, %v341
      %v343 = vmul.f32 %v340, 0.025
      %v344 = vsub.f32 %v342, %v343
      %v345 = vsel %vm319, %v315, 0.0
      %v346 = vsel %vm320, %v316, 0.0
      %v347 = vsel %vm321, %v317, 0.0
      %v348 = vsel %vm322, %v318, 0.0
      %v349 = vld [vmem:[#allocation2] sm:$0x3]
      %v350 = vadd.f32 %v349, %v344
      %351 = vst [vmem:[#allocation2] sm:$0x3] %v350
      %v352 = vld [vmem:[#allocation3] sm:$0x3]
      %v353 = vld [vmem:[#allocation3 + $0x2] sm:$0x3]
      %v354 = vld [vmem:[#allocation3 + $0x4] sm:$0x3]
      %v355 = vld [vmem:[#allocation3 + $0x6] sm:$0x3]
      %v356 = vadd.f32 %v352, %v315
      %v357 = vadd.f32 %v353, %v316
      %v358 = vadd.f32 %v354, %v317
      %v359 = vadd.f32 %v355, %v318
      %360 = vst [vmem:[#allocation3] sm:$0x3] %v356
      %361 = vst [vmem:[#allocation3 + $0x2] sm:$0x3] %v357
      %362 = vst [vmem:[#allocation3 + $0x4] sm:$0x3] %v358
      %363 = vst [vmem:[#allocation3 + $0x6] sm:$0x3] %v359
      %v364 = vld [vmem:[#allocation4] sm:$0x3]
      %v365 = vld [vmem:[#allocation4 + $0x2] sm:$0x3]
      %v366 = vld [vmem:[#allocation4 + $0x4] sm:$0x3]
      %v367 = vld [vmem:[#allocation4 + $0x6] sm:$0x3]
      %v368 = vadd.f32 %v364, %v345
      %v369 = vadd.f32 %v365, %v346
      %v370 = vadd.f32 %v366, %v347
      %v371 = vadd.f32 %v367, %v348
      %372 = vst [vmem:[#allocation4] sm:$0x3] %v368
      %373 = vst [vmem:[#allocation4 + $0x2] sm:$0x3] %v369
      %374 = vst [vmem:[#allocation4 + $0x4] sm:$0x3] %v370
      %375 = vst [vmem:[#allocation4 + $0x6] sm:$0x3] %v371
      // Predicated region
      $region33: #{hyperloss.1} parent=27 // pred_check
        %p376 = pneg %p266
      $region34: #{hyperloss.1} parent=27 // pred_check_branch
        %378 = sbr.rel (%p376) target = $region36
      $region35: #{hyperloss.1} parent=27 // pred_region
        %v379 = vld [vmem:[#allocation2] sm:$0x3]
        %v380 = vsel %vm284, %v379, 0.0
        %381 = vadd.xlane.f32.xlu0 %v380
        %v382 = vpop.xlane.xlu0 %381
        %v383 = vrot.slane %v382, 4
        %v384 = vadd.f32 %v382, %v383
        %v385 = vrot.slane %v384, 2
        %v386 = vadd.f32 %v384, %v385
        %v387 = vrot.slane %v386, 1
        %v388 = vadd.f32 %v386, %v387
        %s389 = vtos %v388
        %v390 = vstv %s389
        %vm391 = vcmask 0
        %392 = vst.msk [vmem:[%s257] sm:$0x1] %vm391, %v390
        %v393 = vld [vmem:[#allocation3] sm:$0x3]
        %v394 = vld [vmem:[#allocation3 + $0x2] sm:$0x3]
        %v395 = vld [vmem:[#allocation3 + $0x4] sm:$0x3]
        %v396 = vld [vmem:[#allocation3 + $0x6] sm:$0x3]
        %v397 = vsel %vm284, %v393, 0.0
        %v398 = vrot.slane %v397, 4
        %v399 = vadd.f32 %v397, %v398
        %v400 = vrot.slane %v399, 2
        %v401 = vadd.f32 %v399, %v400
        %v402 = vrot.slane %v401, 1
        %v403 = vadd.f32 %v401, %v402
        %v404 = vsel %vm284, %v394, 0.0
        %v405 = vrot.slane %v404, 4
        %v406 = vadd.f32 %v404, %v405
        %v407 = vrot.slane %v406, 2
        %v408 = vadd.f32 %v406, %v407
        %v409 = vrot.slane %v408, 1
        %v410 = vadd.f32 %v408, %v409
        %v411 = vsel %vm284, %v395, 0.0
        %v412 = vrot.slane %v411, 4
        %v413 = vadd.f32 %v411, %v412
        %v414 = vrot.slane %v413, 2
        %v415 = vadd.f32 %v413, %v414
        %v416 = vrot.slane %v415, 1
        %v417 = vadd.f32 %v415, %v416
        %v418 = vsel %vm284, %v396, 0.0
        %v419 = vrot.slane %v418, 4
        %v420 = vadd.f32 %v418, %v419
        %v421 = vrot.slane %v420, 2
        %v422 = vadd.f32 %v420, %v421
        %v423 = vrot.slane %v422, 1
        %v424 = vadd.f32 %v422, %v423
        %vm429 = vcmask 1041409
        %v430 = vsel %vm429, %v410, %v403
        %vm431 = vcmask 1042434
        %v432 = vsel %vm431, %v417, %v430
        %vm433 = vcmask 1043459
        %v434 = vsel %vm433, %v424, %v432
        %vm436 = vcmask 1043456
        %v437 = vsel %vm436, %v434, 0.0
        %438 = vadd.xlane.f32.xlu0 %v437
        %v439 = vpop.xlane.xlu0 %438
        %vm440 = vcmask 3072
        %441 = vst.msk [vmem:[%s261] sm:$0xf] %vm440, %v439
        %v442 = vld [vmem:[#allocation4] sm:$0x3]
        %v443 = vld [vmem:[#allocation4 + $0x2] sm:$0x3]
        %v444 = vld [vmem:[#allocation4 + $0x4] sm:$0x3]
        %v445 = vld [vmem:[#allocation4 + $0x6] sm:$0x3]
        %v446 = vsel %vm284, %v442, 0.0
        %v447 = vrot.slane %v446, 4
        %v448 = vadd.f32 %v446, %v447
        %v449 = vrot.slane %v448, 2
        %v450 = vadd.f32 %v448, %v449
        %v451 = vrot.slane %v450, 1
        %v452 = vadd.f32 %v450, %v451
        %v453 = vsel %vm284, %v443, 0.0
        %v454 = vrot.slane %v453, 4
        %v455 = vadd.f32 %v453, %v454
        %v456 = vrot.slane %v455, 2
        %v457 = vadd.f32 %v455, %v456
        %v458 = vrot.slane %v457, 1
        %v459 = vadd.f32 %v457, %v458
        %v460 = vsel %vm284, %v444, 0.0
        %v461 = vrot.slane %v460, 4
        %v462 = vadd.f32 %v460, %v461
        %v463 = vrot.slane %v462, 2
        %v464 = vadd.f32 %v462, %v463
        %v465 = vrot.slane %v464, 1
        %v466 = vadd.f32 %v464, %v465
        %v467 = vsel %vm284, %v445, 0.0
        %v468 = vrot.slane %v467, 4
        %v469 = vadd.f32 %v467, %v468
        %v470 = vrot.slane %v469, 2
        %v471 = vadd.f32 %v469, %v470
        %v472 = vrot.slane %v471, 1
        %v473 = vadd.f32 %v471, %v472
        %v478 = vsel %vm429, %v459, %v452
        %v479 = vsel %vm431, %v466, %v478
        %v480 = vsel %vm433, %v473, %v479
        %v482 = vsel %vm436, %v480, 0.0
        %483 = vadd.xlane.f32.xlu0 %v482
        %v484 = vpop.xlane.xlu0 %483
        %485 = vst.msk [vmem:[%s265] sm:$0xf] %vm440, %v484
      $region36: #{hyperloss.1} parent=27 // pred_fallthru
        _
      %p486 = scmp.lt.s32.totalorder %s20, 1
      %s487 = scalar_select %p486, %s20, 1
      %s488 = scalar_lea.vmem %s2, %s487
      %p489 = scmp.lt.s32.totalorder %s20, 1
      %s490 = scalar_select %p489, %s20, 1
      %s491 = smul.addr %s490, 4
      %s492 = scalar_lea.vmem %s3, %s491
      %p493 = scmp.lt.s32.totalorder %s20, 1
      %s494 = scalar_select %p493, %s20, 1
      %s495 = smul.addr %s494, 4
      %s496 = scalar_lea.vmem %s4, %s495
      // Predicated region
      $region37: #{hyperloss.1} parent=27 // pred_check
        %p497 = pneg %p102
      $region38: #{hyperloss.1} parent=27 // pred_check_branch
        %499 = sbr.rel (%p497) target = $region40
      $region39: #{hyperloss.1} parent=27 // pred_region
        _
      $region40: #{hyperloss.1} parent=27 // pred_fallthru
        _
      // Predicated region
      $region41: #{hyperloss.1} parent=27 // pred_check
        %p500 = pneg %p128
      $region42: #{hyperloss.1} parent=27 // pred_check_branch
        %502 = sbr.rel (%p500) target = $region44
      $region43: #{hyperloss.1} parent=27 // pred_region
        _
      $region44: #{hyperloss.1} parent=27 // pred_fallthru
        _
      // Predicated region
      $region45: #{hyperloss.1} parent=27 // pred_check
        %p503 = pneg %p154
      $region46: #{hyperloss.1} parent=27 // pred_check_branch
        %505 = sbr.rel (%p503) target = $region48
      $region47: #{hyperloss.1} parent=27 // pred_region
        _
      $region48: #{hyperloss.1} parent=27 // pred_fallthru
        _
    $region28: #{hyperloss.1} parent=5 // pred_fallthru
      _
    %p506 = scmp.le.s32.totalorder 2, %s11
    // Predicated region
    $region49: #{hyperloss.1} parent=5 // pred_check
      %p507 = pneg %p506
    $region50: #{hyperloss.1} parent=5 // pred_check_branch
      %509 = sbr.rel (%p507) target = $region52
    $region51: #{hyperloss.1} parent=5 // pred_region
      %s510 = ssub.s32 %s11, 2
      // Predicated region
      $region53: #{hyperloss.1} parent=51 // pred_check
        %p511 = pneg %p108
      $region54: #{hyperloss.1} parent=51 // pred_check_branch
        %513 = sbr.rel (%p511) target = $region56
      $region55: #{hyperloss.1} parent=51 // pred_region
        %p514 = scmp.lt.s32.totalorder %s22, 1
        %s515 = scalar_select %p514, %s22, 1
        %s516 = scalar_lea.vmem %s2, %s515
      $region56: #{hyperloss.1} parent=51 // pred_fallthru
        _
      // Predicated region
      $region57: #{hyperloss.1} parent=51 // pred_check
        %p517 = pneg %p134
      $region58: #{hyperloss.1} parent=51 // pred_check_branch
        %519 = sbr.rel (%p517) target = $region60
      $region59: #{hyperloss.1} parent=51 // pred_region
        %p520 = scmp.lt.s32.totalorder %s22, 1
        %s521 = scalar_select %p520, %s22, 1
        %s522 = smul.addr %s521, 4
        %s523 = scalar_lea.vmem %s3, %s522
      $region60: #{hyperloss.1} parent=51 // pred_fallthru
        _
      // Predicated region
      $region61: #{hyperloss.1} parent=51 // pred_check
        %p524 = pneg %p160
      $region62: #{hyperloss.1} parent=51 // pred_check_branch
        %526 = sbr.rel (%p524) target = $region64
      $region63: #{hyperloss.1} parent=51 // pred_region
        %p527 = scmp.lt.s32.totalorder %s22, 1
        %s528 = scalar_select %p527, %s22, 1
        %s529 = smul.addr %s528, 4
        %s530 = scalar_lea.vmem %s4, %s529
      $region64: #{hyperloss.1} parent=51 // pred_fallthru
        _
    $region52: #{hyperloss.1} parent=5 // pred_fallthru
      _
  $region6: #{hyperloss.1} parent=0 // loop_footer
    %s15 = sadd.s32 1, %s11
  $region7: #{hyperloss.1} parent=0 // loop_footer_branch
    %10 = sbr.rel target = $region3
  $region8: #{hyperloss.1} parent=0 // loop_exit
    _

</llo_original>
